<compile_context>
chip_gen: v7x
topology: tpu7x:2x2x1
jax: 0.10.0
libtpu: 0.0.40
codegen_flags: <defaults>
</compile_context>

<pallas_src>
import functools
import math

import jax
import jax.numpy as jnp
from jax.experimental import pallas as pl
from jax.experimental.pallas import tpu as pltpu


# ----------------------------------------------------------------------------
# Static align_corners=True linear-interpolation matrix (glue, not hot path).
# ----------------------------------------------------------------------------
def _interp_matrix(in_size: int, out_size: int, dtype=jnp.float32):
    j = jnp.arange(out_size, dtype=jnp.float32)
    if out_size > 1:
        pos = j * (in_size - 1) / (out_size - 1)
    else:
        pos = jnp.zeros_like(j)
    i0 = jnp.clip(jnp.floor(pos), 0, in_size - 1).astype(jnp.int32)
    i1 = jnp.clip(i0 + 1, 0, in_size - 1)
    frac = pos - i0.astype(jnp.float32)
    w = (jax.nn.one_hot(i0, in_size, dtype=jnp.float32) * (1.0 - frac)[:, None]
         + jax.nn.one_hot(i1, in_size, dtype=jnp.float32) * frac[:, None])
    return w.T.astype(dtype)                      # (in_size, out_size)


def _round_up(a: int, b: int) -> int:
    return ((a + b - 1) // b) * b


def _const_spec(shape):
    """BlockSpec for an operand whose block never changes: single-buffer it."""
    idx = lambda i, _n=len(shape): (0,) * _n
    try:
        return pl.BlockSpec(shape, idx, pipeline_mode=pl.Buffered(1))
    except (TypeError, AttributeError):
        return pl.BlockSpec(shape, idx)


# ----------------------------------------------------------------------------
# Fused Pallas kernel (one row-tile per grid step).
# ----------------------------------------------------------------------------
def _make_kernel(resample: bool, trainable_add: bool, fused_w: bool,
                 hidden: int, eps: float):
    def kernel(*refs):
        it = iter(refs)
        x_ref = next(it)                                   # (tm, in_size)
        skip_ref = next(it)                                # (tm, skip_size)
        if fused_w:
            wab_ref = next(it)                             # (in_size, 2*hidden)
            bab_ref = next(it)                             # (1, 2*hidden) f32
        else:
            wa_ref = next(it)                              # (in_size, hidden)
            ba_ref = next(it)                              # (1, hidden) f32
            wb_ref = next(it)                              # (in_size, hidden)
            bb_ref = next(it)                              # (1, hidden) f32
        wskip_ref = next(it) if resample else None         # (skip_size, hidden)
        gate_ref = (next(it) if (trainable_add and not resample)
                    else None)                             # (1, hidden) f32
        gamma_ref = next(it)                               # (1, hidden) f32
        beta_ref = next(it)                                # (1, hidden) f32
        o_ref = next(it)                                   # (tm, hidden)

        x = x_ref[...]                                     # native dtype (bf16 ok)
        if fused_w:
            ab = jnp.dot(x, wab_ref[...],
                         preferred_element_type=jnp.float32) + bab_ref[...]
            a = ab[:, :hidden]                             # lane-aligned slice
            b = ab[:, hidden:]
        else:
            a = jnp.dot(x, wa_ref[...],
                        preferred_element_type=jnp.float32) + ba_ref[...]
            b = jnp.dot(x, wb_ref[...],
                        preferred_element_type=jnp.float32) + bb_ref[...]

        # GLU -> running sum s (f32); add the (resampled / gated) skip.
        s = a * jax.nn.sigmoid(b)
        skip = skip_ref[...]
        if resample:
            # trainable_add gate (if any) is pre-folded into wskip columns.
            s = s + jnp.dot(skip, wskip_ref[...],
                            preferred_element_type=jnp.float32)
        elif trainable_add:
            s = s + skip.astype(jnp.float32) * gate_ref[...]
        else:
            s = s + skip.astype(jnp.float32)

        # LayerNorm over the last dim (population variance, eps inside sqrt).
        mean = jnp.mean(s, axis=-1, keepdims=True)
        c = s - mean
        var = jnp.mean(c * c, axis=-1, keepdims=True)
        inv = jax.lax.rsqrt(var + eps)
        o_ref[...] = (c * (inv * gamma_ref[...]) + beta_ref[...]).astype(o_ref.dtype)

    return kernel


# ----------------------------------------------------------------------------
# Wrapper
# ----------------------------------------------------------------------------
@functools.partial(jax.jit,
                   static_argnames=("hidden_size", "trainable_add", "eps"))
def gate_add_norm(x, skip, wa, ba, wb, bb, ln_gamma, ln_beta, add_mask=None, *,
                  hidden_size: int, trainable_add: bool = False, eps: float = 1e-5):
    """JAX/Pallas equivalent of _GateAddNorm.forward (dropout=None path)."""
    orig_shape = x.shape
    in_size = orig_shape[-1]
    skip_size = skip.shape[-1]
    resample = (skip_size != hidden_size)
    fused_w = (hidden_size % 128 == 0)

    # Flatten leading dims (time-distributed application); no dtype cast of the
    # large operands here.
    x2 = x.reshape(-1, in_size)
    s2 = skip.reshape(-1, skip_size)
    n = x2.shape[0]

    # Compute dtype for the MXU: keep bf16 native, everything else f32.
    f32 = jnp.float32
    x_cdt = jnp.bfloat16 if x2.dtype == jnp.bfloat16 else f32
    s_cdt = jnp.bfloat16 if s2.dtype == jnp.bfloat16 else f32

    # Parameters are tiny -> prepare at trace time (glue, not hot path).
    ba2 = ba.reshape(1, hidden_size).astype(f32)
    bb2 = bb.reshape(1, hidden_size).astype(f32)
    gamma2 = ln_gamma.reshape(1, hidden_size).astype(f32)
    beta2 = ln_beta.reshape(1, hidden_size).astype(f32)

    inputs = [x2, s2]
    in_specs = [None, None]   # filled once tm is known

    if fused_w:
        wab = jnp.concatenate([wa, wb], axis=-1).astype(x_cdt)      # (in, 2H)
        bab = jnp.concatenate([ba2, bb2], axis=-1)                  # (1, 2H) f32
        inputs += [wab, bab]
        in_specs += [_const_spec((in_size, 2 * hidden_size)),
                     _const_spec((1, 2 * hidden_size))]
    else:
        inputs += [wa.astype(x_cdt), ba2, wb.astype(x_cdt), bb2]
        in_specs += [_const_spec((in_size, hidden_size)),
                     _const_spec((1, hidden_size)),
                     _const_spec((in_size, hidden_size)),
                     _const_spec((1, hidden_size))]

    if resample:
        w_int = _interp_matrix(skip_size, hidden_size)
        if trainable_add:
            gate = jax.nn.sigmoid(add_mask.astype(f32)) * 2.0
            w_int = w_int * gate[None, :]          # fold gate into columns
        inputs.append(w_int.astype(s_cdt))
        in_specs.append(_const_spec((skip_size, hidden_size)))
    elif trainable_add:
        gate = (jax.nn.sigmoid(add_mask.astype(f32)) * 2.0).reshape(1, hidden_size)
        inputs.append(gate)
        in_specs.append(_const_spec((1, hidden_size)))

    inputs += [gamma2, beta2]
    in_specs += [_const_spec((1, hidden_size)), _const_spec((1, hidden_size))]

    # ---- generation-aware row-tile selection ---------------------------------
    x_it = jnp.dtype(x2.dtype).itemsize
    s_it = jnp.dtype(s2.dtype).itemsize
    w_it = jnp.dtype(x_cdt).itemsize
    # sublane multiple: 8 for f32, 16 for bf16, 32 for int8/fp8
    sub = 8 * (4 // max(1, min(4, x_it, s_it)))

    weight_bytes = in_size * 2 * hidden_size * w_it
    if resample:
        weight_bytes += skip_size * hidden_size * jnp.dtype(s_cdt).itemsize
    weight_bytes *= 2                              # assume worst case (double-buffered)

    # per-row VMEM: double-buffered x/skip/out blocks + ~8 H-wide f32 temporaries
    bytes_per_row = (2 * in_size * x_it + 2 * skip_size * s_it
                     + 2 * hidden_size * x_it + 32 * hidden_size)
    budget = 24 << 20                              # fits v5e/v7x scoped limits
    tm = int(max(sub, min(1024, (budget - weight_bytes) // bytes_per_row)))
    tm = max(sub, (tm // sub) * sub)
    if n <= 2 * tm:
        # split small problems into >= 2 grid steps so both v7x TCs get work
        tm = max(sub, _round_up(-(-n // 2), sub))
    grid = (pl.cdiv(n, tm),)

    in_specs[0] = pl.BlockSpec((tm, in_size), lambda i: (i, 0))
    in_specs[1] = pl.BlockSpec((tm, skip_size), lambda i: (i, 0))

    est_vmem = weight_bytes + tm * bytes_per_row + (2 << 20)
    vmem_limit = int(min(56 << 20, max(2 * est_vmem, 16 << 20)))

    flops = 2 * n * in_size * 2 * hidden_size + 10 * n * hidden_size
    if resample:
        flops += 2 * n * skip_size * hidden_size
    bytes_accessed = (n * (in_size * x_it + skip_size * s_it + hidden_size * x_it)
                      + weight_bytes // 2)
    transcendentals = n * (hidden_size + 1)

    kernel = _make_kernel(resample, trainable_add, fused_w, hidden_size, eps)

    y = pl.pallas_call(
        kernel,
        out_shape=jax.ShapeDtypeStruct((n, hidden_size), x.dtype),
        grid_spec=pltpu.PrefetchScalarGridSpec(
            num_scalar_prefetch=0,
            grid=grid,
            in_specs=in_specs,
            out_specs=pl.BlockSpec((tm, hidden_size), lambda i: (i, 0)),
        ),
        compiler_params=pltpu.CompilerParams(
            dimension_semantics=("parallel",),
            vmem_limit_bytes=vmem_limit),
        cost_estimate=pl.CostEstimate(flops=int(flops),
                                      transcendentals=int(transcendentals),
                                      bytes_accessed=int(bytes_accessed)),
    )(*inputs)

    if len(orig_shape) <= 2:
        return y
    return y.reshape(orig_shape[:-1] + (hidden_size,))


# ----------------------------------------------------------------------------
# Pure-JAX reference (correctness check only; always f32 internally)
# ----------------------------------------------------------------------------
def _reference(x, skip, wa, ba, wb, bb, gamma, beta, add_mask, *,
               hidden_size, trainable_add, eps=1e-5):
    in_size = x.shape[-1]
    skip_size = skip.shape[-1]
    x2 = x.reshape(-1, in_size).astype(jnp.float32)
    s2 = skip.reshape(-1, skip_size).astype(jnp.float32)
    a = x2 @ wa.astype(jnp.float32) + ba.astype(jnp.float32)[None, :]
    b = x2 @ wb.astype(jnp.float32) + bb.astype(jnp.float32)[None, :]
    glu = a * jax.nn.sigmoid(b)
    if skip_size != hidden_size:
        s2 = s2 @ _interp_matrix(skip_size, hidden_size)
    if trainable_add:
        s2 = s2 * jax.nn.sigmoid(add_mask.astype(jnp.float32))[None, :] * 2.0
    s = glu + s2
    mean = s.mean(-1, keepdims=True)
    var = ((s - mean) ** 2).mean(-1, keepdims=True)
    y = (s - mean) / jnp.sqrt(var + eps) * gamma.astype(jnp.float32)[None, :] \
        + beta.astype(jnp.float32)[None, :]
    y = y.astype(x.dtype)
    if x.ndim <= 2:
        return y
    return y.reshape(x.shape[:-1] + (hidden_size,))


if __name__ == "__main__":
    key = jax.random.PRNGKey(0)
    B, T = 2, 8
    INPUT_SIZE = 32
    HIDDEN = 32
    SKIP_SIZE = 16     # != HIDDEN -> exercises the resample (interpolation) path

    k1, k2, k3, k4, k5 = jax.random.split(key, 5)
    x = jax.random.normal(k1, (B, T, INPUT_SIZE), dtype=jnp.float32)
    skip = jax.random.normal(k2, (B, T, SKIP_SIZE), dtype=jnp.float32)

    scale = math.sqrt(6.0 / (INPUT_SIZE + 2 * HIDDEN))
    wa = jax.random.uniform(k3, (INPUT_SIZE, HIDDEN), jnp.float32, -scale, scale)
    wb = jax.random.uniform(k4, (INPUT_SIZE, HIDDEN), jnp.float32, -scale, scale)
    ba = jnp.zeros((HIDDEN,), jnp.float32)
    bb = jnp.zeros((HIDDEN,), jnp.float32)
    gamma = jnp.ones((HIDDEN,), jnp.float32)
    beta = jnp.zeros((HIDDEN,), jnp.float32)
    add_mask = 0.5 * jax.random.normal(k5, (HIDDEN,), dtype=jnp.float32)

    # 1) resample path + trainable_add (f32)
    y = jax.block_until_ready(
        gate_add_norm(x, skip, wa, ba, wb, bb, gamma, beta, add_mask,
                      hidden_size=HIDDEN, trainable_add=True))
    y_ref = _reference(x, skip, wa, ba, wb, bb, gamma, beta, add_mask,
                       hidden_size=HIDDEN, trainable_add=True)
    assert y.shape == (B, T, HIDDEN), y.shape
    assert jnp.allclose(y, y_ref, atol=1e-5, rtol=1e-5)

    # 2) default config: skip_size == hidden (no resample), trainable_add=False
    skip_same = jax.random.normal(k2, (B, T, HIDDEN), dtype=jnp.float32)
    y2 = jax.block_until_ready(
        gate_add_norm(x, skip_same, wa, ba, wb, bb, gamma, beta, None,
                      hidden_size=HIDDEN, trainable_add=False))
    y2_ref = _reference(x, skip_same, wa, ba, wb, bb, gamma, beta, None,
                        hidden_size=HIDDEN, trainable_add=False)
    assert jnp.allclose(y2, y2_ref, atol=1e-5, rtol=1e-5)

    # 3) 2-D (non time-distributed) path
    x2d = x.reshape(-1, INPUT_SIZE)
    s2d = skip.reshape(-1, SKIP_SIZE)
    y3 = jax.block_until_ready(
        gate_add_norm(x2d, s2d, wa, ba, wb, bb, gamma, beta, add_mask,
                      hidden_size=HIDDEN, trainable_add=True))
    y3_ref = _reference(x2d, s2d, wa, ba, wb, bb, gamma, beta, add_mask,
                        hidden_size=HIDDEN, trainable_add=True)
    assert jnp.allclose(y3, y3_ref, atol=1e-5, rtol=1e-5)

    # 4) bf16 path with hidden % 128 == 0 (fused single-matmul GLU weights)
    IN_B, H_B = 64, 128
    kb1, kb2, kb3, kb4 = jax.random.split(jax.random.PRNGKey(1), 4)
    xb = jax.random.normal(kb1, (B, T, IN_B), dtype=jnp.bfloat16)
    sb = jax.random.normal(kb2, (B, T, H_B), dtype=jnp.bfloat16)
    scale_b = math.sqrt(6.0 / (IN_B + 2 * H_B))
    wab_ = jax.random.uniform(kb3, (IN_B, H_B), jnp.float32, -scale_b, scale_b)
    wbb_ = jax.random.uniform(kb4, (IN_B, H_B), jnp.float32, -scale_b, scale_b)
    zb = jnp.zeros((H_B,), jnp.float32)
    ob = jnp.ones((H_B,), jnp.float32)
    y4 = jax.block_until_ready(
        gate_add_norm(xb, sb, wab_, zb, wbb_, zb, ob, zb, None,
                      hidden_size=H_B, trainable_add=False))
    y4_ref = _reference(xb, sb, wab_, zb, wbb_, zb, ob, zb, None,
                        hidden_size=H_B, trainable_add=False)
    assert y4.dtype == jnp.bfloat16
    assert jnp.allclose(y4.astype(jnp.float32), y4_ref.astype(jnp.float32),
                        atol=1e-1, rtol=1e-1)

    print("KERNEL_OK")
</pallas_src>

<mosaic_0001>
module attributes {stable_mosaic.version = 11 : i64} {
  func.func @kernel(%arg0: i32, %arg1: memref<8x32xf32, #tpu.memory_space<vmem>>, %arg2: memref<8x16xf32, #tpu.memory_space<vmem>>, %arg3: memref<32x32xf32, #tpu.memory_space<vmem>>, %arg4: memref<1x32xf32, #tpu.memory_space<vmem>>, %arg5: memref<32x32xf32, #tpu.memory_space<vmem>>, %arg6: memref<1x32xf32, #tpu.memory_space<vmem>>, %arg7: memref<16x32xf32, #tpu.memory_space<vmem>>, %arg8: memref<1x32xf32, #tpu.memory_space<vmem>>, %arg9: memref<1x32xf32, #tpu.memory_space<vmem>>, %arg10: memref<8x32xf32, #tpu.memory_space<vmem>>) attributes {dimension_semantics = [#tpu.dimension_semantics<parallel>], iteration_bounds = array<i64: 2>, scalar_prefetch = 0 : i64, scratch_operands = 0 : i64, tpu.core_type = #tpu.core_type<tc>, window_params = [{transform_indices = @transform_0, window_bounds = array<i64: 8, 32>}, {transform_indices = @transform_1, window_bounds = array<i64: 8, 16>}, {pipeline_mode = #tpu.pipeline_mode<synchronous>, transform_indices = @transform_2, window_bounds = array<i64: 32, 32>}, {pipeline_mode = #tpu.pipeline_mode<synchronous>, transform_indices = @transform_3, window_bounds = array<i64: 1, 32>}, {pipeline_mode = #tpu.pipeline_mode<synchronous>, transform_indices = @transform_4, window_bounds = array<i64: 32, 32>}, {pipeline_mode = #tpu.pipeline_mode<synchronous>, transform_indices = @transform_5, window_bounds = array<i64: 1, 32>}, {pipeline_mode = #tpu.pipeline_mode<synchronous>, transform_indices = @transform_6, window_bounds = array<i64: 16, 32>}, {pipeline_mode = #tpu.pipeline_mode<synchronous>, transform_indices = @transform_7, window_bounds = array<i64: 1, 32>}, {pipeline_mode = #tpu.pipeline_mode<synchronous>, transform_indices = @transform_8, window_bounds = array<i64: 1, 32>}, {transform_indices = @transform_9, window_bounds = array<i64: 8, 32>}]} {
    %c0 = arith.constant 0 : index
    %c0_0 = arith.constant 0 : index
    %0 = vector.load %arg1[%c0, %c0_0] : memref<8x32xf32, #tpu.memory_space<vmem>>, vector<8x32xf32>
    %c0_1 = arith.constant 0 : index
    %c0_2 = arith.constant 0 : index
    %1 = vector.load %arg3[%c0_1, %c0_2] : memref<32x32xf32, #tpu.memory_space<vmem>>, vector<32x32xf32>
    %cst = arith.constant dense<0.000000e+00> : vector<8x32xf32>
    %2 = tpu.matmul %0, %1, %cst {dimension_numbers = #tpu.dot_dimension_numbers<[1], [0], [0], [1], [0, 0, 1, 1], [], []>} : vector<8x32xf32>, vector<32x32xf32>, vector<8x32xf32> -> vector<8x32xf32>
    %c0_3 = arith.constant 0 : index
    %c0_4 = arith.constant 0 : index
    %3 = vector.load %arg4[%c0_3, %c0_4] : memref<1x32xf32, #tpu.memory_space<vmem>>, vector<1x32xf32>
    %4 = vector.broadcast %3 : vector<1x32xf32> to vector<8x32xf32>
    %5 = arith.addf %2, %4 : vector<8x32xf32>
    %c0_5 = arith.constant 0 : index
    %c0_6 = arith.constant 0 : index
    %6 = vector.load %arg5[%c0_5, %c0_6] : memref<32x32xf32, #tpu.memory_space<vmem>>, vector<32x32xf32>
    %cst_7 = arith.constant dense<0.000000e+00> : vector<8x32xf32>
    %7 = tpu.matmul %0, %6, %cst_7 {dimension_numbers = #tpu.dot_dimension_numbers<[1], [0], [0], [1], [0, 0, 1, 1], [], []>} : vector<8x32xf32>, vector<32x32xf32>, vector<8x32xf32> -> vector<8x32xf32>
    %c0_8 = arith.constant 0 : index
    %c0_9 = arith.constant 0 : index
    %8 = vector.load %arg6[%c0_8, %c0_9] : memref<1x32xf32, #tpu.memory_space<vmem>>, vector<1x32xf32>
    %9 = vector.broadcast %8 : vector<1x32xf32> to vector<8x32xf32>
    %10 = arith.addf %7, %9 : vector<8x32xf32>
    %11 = arith.negf %10 : vector<8x32xf32>
    %12 = math.exp %11 : vector<8x32xf32>
    %cst_10 = arith.constant 1.000000e+00 : f32
    %13 = vector.broadcast %cst_10 : f32 to vector<8x32xf32>
    %14 = arith.addf %13, %12 : vector<8x32xf32>
    %15 = arith.divf %13, %14 : vector<8x32xf32>
    %16 = arith.mulf %5, %15 : vector<8x32xf32>
    %c0_11 = arith.constant 0 : index
    %c0_12 = arith.constant 0 : index
    %17 = vector.load %arg2[%c0_11, %c0_12] : memref<8x16xf32, #tpu.memory_space<vmem>>, vector<8x16xf32>
    %c0_13 = arith.constant 0 : index
    %c0_14 = arith.constant 0 : index
    %18 = vector.load %arg7[%c0_13, %c0_14] : memref<16x32xf32, #tpu.memory_space<vmem>>, vector<16x32xf32>
    %cst_15 = arith.constant dense<0.000000e+00> : vector<8x32xf32>
    %19 = tpu.matmul %17, %18, %cst_15 {dimension_numbers = #tpu.dot_dimension_numbers<[1], [0], [0], [1], [0, 0, 1, 1], [], []>} : vector<8x16xf32>, vector<16x32xf32>, vector<8x32xf32> -> vector<8x32xf32>
    %20 = arith.addf %16, %19 : vector<8x32xf32>
    %cst_16 = arith.constant dense<0.000000e+00> : vector<8xf32>
    %21 = vector.multi_reduction <add>, %20, %cst_16 [1] : vector<8x32xf32> to vector<8xf32>
    %22 = vector.shape_cast %21 : vector<8xf32> to vector<8x1xf32>
    %cst_17 = arith.constant 3.200000e+01 : f32
    %23 = vector.broadcast %cst_17 : f32 to vector<8x1xf32>
    %24 = arith.divf %22, %23 : vector<8x1xf32>
    %25 = vector.broadcast %24 : vector<8x1xf32> to vector<8x32xf32>
    %26 = arith.subf %20, %25 : vector<8x32xf32>
    %27 = arith.mulf %26, %26 : vector<8x32xf32>
    %cst_18 = arith.constant dense<0.000000e+00> : vector<8xf32>
    %28 = vector.multi_reduction <add>, %27, %cst_18 [1] : vector<8x32xf32> to vector<8xf32>
    %29 = vector.shape_cast %28 : vector<8xf32> to vector<8x1xf32>
    %cst_19 = arith.constant 3.200000e+01 : f32
    %30 = vector.broadcast %cst_19 : f32 to vector<8x1xf32>
    %31 = arith.divf %29, %30 : vector<8x1xf32>
    %cst_20 = arith.constant 9.99999974E-6 : f32
    %32 = vector.broadcast %cst_20 : f32 to vector<8x1xf32>
    %33 = arith.addf %31, %32 : vector<8x1xf32>
    %34 = math.rsqrt %33 : vector<8x1xf32>
    %c0_21 = arith.constant 0 : index
    %c0_22 = arith.constant 0 : index
    %35 = vector.load %arg8[%c0_21, %c0_22] : memref<1x32xf32, #tpu.memory_space<vmem>>, vector<1x32xf32>
    %36 = vector.broadcast %34 : vector<8x1xf32> to vector<8x32xf32>
    %37 = vector.broadcast %35 : vector<1x32xf32> to vector<8x32xf32>
    %38 = arith.mulf %36, %37 : vector<8x32xf32>
    %39 = arith.mulf %26, %38 : vector<8x32xf32>
    %c0_23 = arith.constant 0 : index
    %c0_24 = arith.constant 0 : index
    %40 = vector.load %arg9[%c0_23, %c0_24] : memref<1x32xf32, #tpu.memory_space<vmem>>, vector<1x32xf32>
    %41 = vector.broadcast %40 : vector<1x32xf32> to vector<8x32xf32>
    %42 = arith.addf %39, %41 : vector<8x32xf32>
    %c0_25 = arith.constant 0 : index
    %c0_26 = arith.constant 0 : index
    %43 = vector.load %arg10[%c0_25, %c0_26] : memref<8x32xf32, #tpu.memory_space<vmem>>, vector<8x32xf32>
    tpu.vector_store %arg10[%c0_25, %c0_26], %42 {strides = array<i32>} : memref<8x32xf32, #tpu.memory_space<vmem>>, vector<8x32xf32>,
    return
  }
  func.func @transform_0(%arg0: i32) -> (i32, i32) {
    %c0_i32 = arith.constant 0 : i32
    %c0_i32_0 = arith.constant 0 : i32
    return %arg0, %c0_i32 : i32, i32
  }
  func.func @transform_1(%arg0: i32) -> (i32, i32) {
    %c0_i32 = arith.constant 0 : i32
    %c0_i32_0 = arith.constant 0 : i32
    return %arg0, %c0_i32 : i32, i32
  }
  func.func @transform_2(%arg0: i32) -> (i32, i32) {
    %c0_i32 = arith.constant 0 : i32
    %c0_i32_0 = arith.constant 0 : i32
    %c0_i32_1 = arith.constant 0 : i32
    return %c0_i32, %c0_i32_0 : i32, i32
  }
  func.func @transform_3(%arg0: i32) -> (i32, i32) {
    %c0_i32 = arith.constant 0 : i32
    %c0_i32_0 = arith.constant 0 : i32
    %c0_i32_1 = arith.constant 0 : i32
    return %c0_i32, %c0_i32_0 : i32, i32
  }
  func.func @transform_4(%arg0: i32) -> (i32, i32) {
    %c0_i32 = arith.constant 0 : i32
    %c0_i32_0 = arith.constant 0 : i32
    %c0_i32_1 = arith.constant 0 : i32
    return %c0_i32, %c0_i32_0 : i32, i32
  }
  func.func @transform_5(%arg0: i32) -> (i32, i32) {
    %c0_i32 = arith.constant 0 : i32
    %c0_i32_0 = arith.constant 0 : i32
    %c0_i32_1 = arith.constant 0 : i32
    return %c0_i32, %c0_i32_0 : i32, i32
  }
  func.func @transform_6(%arg0: i32) -> (i32, i32) {
    %c0_i32 = arith.constant 0 : i32
    %c0_i32_0 = arith.constant 0 : i32
    %c0_i32_1 = arith.constant 0 : i32
    return %c0_i32, %c0_i32_0 : i32, i32
  }
  func.func @transform_7(%arg0: i32) -> (i32, i32) {
    %c0_i32 = arith.constant 0 : i32
    %c0_i32_0 = arith.constant 0 : i32
    %c0_i32_1 = arith.constant 0 : i32
    return %c0_i32, %c0_i32_0 : i32, i32
  }
  func.func @transform_8(%arg0: i32) -> (i32, i32) {
    %c0_i32 = arith.constant 0 : i32
    %c0_i32_0 = arith.constant 0 : i32
    %c0_i32_1 = arith.constant 0 : i32
    return %c0_i32, %c0_i32_0 : i32, i32
  }
  func.func @transform_9(%arg0: i32) -> (i32, i32) {
    %c0_i32 = arith.constant 0 : i32
    %c0_i32_0 = arith.constant 0 : i32
    return %arg0, %c0_i32 : i32, i32
  }
}

</mosaic_0001>

<llo_original>
// kernel: gate_add_norm.1
$region0: #{gate_add_norm.1}
  #allocation0 [shape = 'u32[]', space=smem, size = 0x4, offset = 0x4, fixed_abs, tag = 'smem constant byte address 0x4 - core index']
  #allocation1 [shape = 'u32[144,128]{1,0:T(1,128)}', space=vmem, size = 0x12000, scoped, tag = 'internal scratch']
  %s0 = inlined_call_operand.hbm [shape: f32[16,32], index: 0, kind: input, shape index: {}]
  %s1 = inlined_call_operand.hbm [shape: f32[16,16], index: 1, kind: input, shape index: {}]
  %s2 = inlined_call_operand.vmem [shape: f32[32,32], index: 2, kind: input, shape index: {}]
  %s3 = inlined_call_operand.vmem [shape: f32[1,32], index: 3, kind: input, shape index: {}]
  %s4 = inlined_call_operand.vmem [shape: f32[32,32], index: 4, kind: input, shape index: {}]
  %s5 = inlined_call_operand.vmem [shape: f32[1,32], index: 5, kind: input, shape index: {}]
  %s6 = inlined_call_operand.vmem [shape: f32[16,32], index: 6, kind: input, shape index: {}]
  %s7 = inlined_call_operand.vmem [shape: f32[1,32], index: 7, kind: input, shape index: {}]
  %s8 = inlined_call_operand.vmem [shape: f32[1,32], index: 8, kind: input, shape index: {}]
  %s9 = inlined_call_operand.hbm [shape: f32[16,32], index: 9, kind: output, shape index: {}]
  %s10 = sld [smem:[#allocation0]]
  $region77: #{gate_add_norm.1} parent=0
    _
  %s12 = ssub.s32 1, %s10
  %s13 = scalar_select 0, %s12, %s10
  $region1: #{gate_add_norm.1} parent=0
    #allocation2 [shape = 'u8[8192]{0}', space=vmem, size = 0x2000, scoped, tag = 'input window, operand 0']
    #allocation3 [shape = 's32[2]{0}', space=sflag, size = 0x8, scoped, tag = 'scoped memory for gate_add_norm.1']
    #allocation4 [shape = 's32[2]{0}', space=sflag, size = 0x8, scoped, tag = 'scoped memory for gate_add_norm.1']
    #allocation5 [shape = 'u8[8192]{0}', space=vmem, size = 0x2000, scoped, tag = 'input window, operand 1']
    #allocation6 [shape = 's32[2]{0}', space=sflag, size = 0x8, scoped, tag = 'scoped memory for gate_add_norm.1']
    #allocation7 [shape = 'u8[8192]{0}', space=vmem, size = 0x2000, scoped, tag = 'output window, operand 0']
    %14 = vsyncpa [#allocation3], 0
    %s15 = scalar_lea.sflag [#allocation3], 1
    %16 = vsyncpa %s15, 0
    %17 = vsyncpa [#allocation6], 0
    %s18 = scalar_lea.sflag [#allocation6], 1
    %19 = vsyncpa %s18, 0
    %20 = vsyncpa [#allocation4], 0
    %s21 = scalar_lea.sflag [#allocation4], 1
    %22 = vsyncpa %s21, 0
    loop: start=0, step=1, limit=4
    $region2: #{gate_add_norm.1} parent=1 // loop_pre_header
      _
    $region3: #{gate_add_norm.1} parent=1 // loop_header
      %s24 = sphi 0, %s28
      %p25 = scmp.ge.s32.totalorder %s24, 4
      %s34 = sphi 0, %s36
      %s37 = sphi 0, %s34
      %s38 = sphi 0, %s37
      %s54 = sphi 0, %s38
      %s60 = sphi 0, %s62
      %s63 = sphi 0, %s60
      %s64 = sphi 0, %s63
      %s80 = sphi 0, %s64
      %s84 = sphi 0, %s84
      %s86 = sphi 0, %s84
      %s87 = sphi 0, %s86
      %s101 = sphi 0, %s87
      %s105 = sphi 0, %s105
      %s107 = sphi 0, %s105
      %s108 = sphi 0, %s107
      %s122 = sphi 0, %s108
      %s126 = sphi 0, %s126
      %s128 = sphi 0, %s126
      %s129 = sphi 0, %s128
      %s143 = sphi 0, %s129
      %s147 = sphi 0, %s147
      %s149 = sphi 0, %s147
      %s150 = sphi 0, %s149
      %s164 = sphi 0, %s150
      %s168 = sphi 0, %s168
      %s170 = sphi 0, %s168
      %s171 = sphi 0, %s170
      %s185 = sphi 0, %s171
      %s189 = sphi 0, %s189
      %s191 = sphi 0, %s189
      %s192 = sphi 0, %s191
      %s206 = sphi 0, %s192
      %s210 = sphi 0, %s210
      %s212 = sphi 0, %s210
      %s213 = sphi 0, %s212
      %s227 = sphi 0, %s213
      %s233 = sphi 0, %s235
      %s236 = sphi 0, %s233
      %s237 = sphi 0, %s236
      %s253 = sphi 0, %s237
    $region4: #{gate_add_norm.1} parent=1 // loop_header_branch
      %27 = sbr.rel (%p25) target = $region8
    $region5: #{gate_add_norm.1} parent=1 // loop_body
      %s29 = ssub.s32 %s24, 1
      %s30 = ssub.s32 %s24, 2
      %s31 = sadd.s32 %s24, 1
      %s32 = ssub.s32 %s24, %s31
      %p33 = scmp.eq.s32.totalorder %s32, 0
      %s35 = sadd.s32 %s34, 1
      %s36 = scalar_select %p33, %s34, %s35
      %p39 = pneg %p33
      %p40 = scmp.eq.s32.totalorder %s24, 1
      %p41 = por %p39, %p40
      %p42 = scmp.ne.s32.totalorder %s34, %s37
      %p43 = scmp.eq.s32.totalorder %s24, 0
      %p44 = por %p42, %p43
      %p45 = scmp.ne.s32.totalorder %s34, %s37
      %p46 = scmp.eq.s32.totalorder %s29, 1
      %p47 = por %p45, %p46
      %p48 = scmp.ne.s32.totalorder %s37, %s38
      %p49 = scmp.eq.s32.totalorder %s29, 0
      %p50 = por %p48, %p49
      %p51 = scmp.ne.s32.totalorder %s37, %s38
      %p52 = scmp.eq.s32.totalorder %s30, 1
      %p53 = por %p51, %p52
      %p55 = scmp.ne.s32.totalorder %s38, %s54
      %p56 = scmp.eq.s32.totalorder %s30, 0
      %p57 = por %p55, %p56
      %s58 = ssub.s32 %s24, %s31
      %p59 = scmp.eq.s32.totalorder %s58, 0
      %s61 = sadd.s32 %s60, 1
      %s62 = scalar_select %p59, %s60, %s61
      %p65 = pneg %p59
      %p66 = scmp.eq.s32.totalorder %s24, 1
      %p67 = por %p65, %p66
      %p68 = scmp.ne.s32.totalorder %s60, %s63
      %p69 = scmp.eq.s32.totalorder %s24, 0
      %p70 = por %p68, %p69
      %p71 = scmp.ne.s32.totalorder %s60, %s63
      %p72 = scmp.eq.s32.totalorder %s29, 1
      %p73 = por %p71, %p72
      %p74 = scmp.ne.s32.totalorder %s63, %s64
      %p75 = scmp.eq.s32.totalorder %s29, 0
      %p76 = por %p74, %p75
      %p77 = scmp.ne.s32.totalorder %s63, %s64
      %p78 = scmp.eq.s32.totalorder %s30, 1
      %p79 = por %p77, %p78
      %p81 = scmp.ne.s32.totalorder %s64, %s80
      %p82 = scmp.eq.s32.totalorder %s30, 0
      %p83 = por %p81, %p82
      %s85 = sadd.s32 %s84, 1
      %p88 = scmp.eq.s32.totalorder %s24, 1
      %p89 = scmp.ne.s32.totalorder %s84, %s86
      %p90 = scmp.eq.s32.totalorder %s24, 0
      %p91 = por %p89, %p90
      %p92 = scmp.ne.s32.totalorder %s84, %s86
      %p93 = scmp.eq.s32.totalorder %s29, 1
      %p94 = por %p92, %p93
      %p95 = scmp.ne.s32.totalorder %s86, %s87
      %p96 = scmp.eq.s32.totalorder %s29, 0
      %p97 = por %p95, %p96
      %p98 = scmp.ne.s32.totalorder %s86, %s87
      %p99 = scmp.eq.s32.totalorder %s30, 1
      %p100 = por %p98, %p99
      %p102 = scmp.ne.s32.totalorder %s87, %s101
      %p103 = scmp.eq.s32.totalorder %s30, 0
      %p104 = por %p102, %p103
      %s106 = sadd.s32 %s105, 1
      %p109 = scmp.eq.s32.totalorder %s24, 1
      %p110 = scmp.ne.s32.totalorder %s105, %s107
      %p111 = scmp.eq.s32.totalorder %s24, 0
      %p112 = por %p110, %p111
      %p113 = scmp.ne.s32.totalorder %s105, %s107
      %p114 = scmp.eq.s32.totalorder %s29, 1
      %p115 = por %p113, %p114
      %p116 = scmp.ne.s32.totalorder %s107, %s108
      %p117 = scmp.eq.s32.totalorder %s29, 0
      %p118 = por %p116, %p117
      %p119 = scmp.ne.s32.totalorder %s107, %s108
      %p120 = scmp.eq.s32.totalorder %s30, 1
      %p121 = por %p119, %p120
      %p123 = scmp.ne.s32.totalorder %s108, %s122
      %p124 = scmp.eq.s32.totalorder %s30, 0
      %p125 = por %p123, %p124
      %s127 = sadd.s32 %s126, 1
      %p130 = scmp.eq.s32.totalorder %s24, 1
      %p131 = scmp.ne.s32.totalorder %s126, %s128
      %p132 = scmp.eq.s32.totalorder %s24, 0
      %p133 = por %p131, %p132
      %p134 = scmp.ne.s32.totalorder %s126, %s128
      %p135 = scmp.eq.s32.totalorder %s29, 1
      %p136 = por %p134, %p135
      %p137 = scmp.ne.s32.totalorder %s128, %s129
      %p138 = scmp.eq.s32.totalorder %s29, 0
      %p139 = por %p137, %p138
      %p140 = scmp.ne.s32.totalorder %s128, %s129
      %p141 = scmp.eq.s32.totalorder %s30, 1
      %p142 = por %p140, %p141
      %p144 = scmp.ne.s32.totalorder %s129, %s143
      %p145 = scmp.eq.s32.totalorder %s30, 0
      %p146 = por %p144, %p145
      %s148 = sadd.s32 %s147, 1
      %p151 = scmp.eq.s32.totalorder %s24, 1
      %p152 = scmp.ne.s32.totalorder %s147, %s149
      %p153 = scmp.eq.s32.totalorder %s24, 0
      %p154 = por %p152, %p153
      %p155 = scmp.ne.s32.totalorder %s147, %s149
      %p156 = scmp.eq.s32.totalorder %s29, 1
      %p157 = por %p155, %p156
      %p158 = scmp.ne.s32.totalorder %s149, %s150
      %p159 = scmp.eq.s32.totalorder %s29, 0
      %p160 = por %p158, %p159
      %p161 = scmp.ne.s32.totalorder %s149, %s150
      %p162 = scmp.eq.s32.totalorder %s30, 1
      %p163 = por %p161, %p162
      %p165 = scmp.ne.s32.totalorder %s150, %s164
      %p166 = scmp.eq.s32.totalorder %s30, 0
      %p167 = por %p165, %p166
      %s169 = sadd.s32 %s168, 1
      %p172 = scmp.eq.s32.totalorder %s24, 1
      %p173 = scmp.ne.s32.totalorder %s168, %s170
      %p174 = scmp.eq.s32.totalorder %s24, 0
      %p175 = por %p173, %p174
      %p176 = scmp.ne.s32.totalorder %s168, %s170
      %p177 = scmp.eq.s32.totalorder %s29, 1
      %p178 = por %p176, %p177
      %p179 = scmp.ne.s32.totalorder %s170, %s171
      %p180 = scmp.eq.s32.totalorder %s29, 0
      %p181 = por %p179, %p180
      %p182 = scmp.ne.s32.totalorder %s170, %s171
      %p183 = scmp.eq.s32.totalorder %s30, 1
      %p184 = por %p182, %p183
      %p186 = scmp.ne.s32.totalorder %s171, %s185
      %p187 = scmp.eq.s32.totalorder %s30, 0
      %p188 = por %p186, %p187
      %s190 = sadd.s32 %s189, 1
      %p193 = scmp.eq.s32.totalorder %s24, 1
      %p194 = scmp.ne.s32.totalorder %s189, %s191
      %p195 = scmp.eq.s32.totalorder %s24, 0
      %p196 = por %p194, %p195
      %p197 = scmp.ne.s32.totalorder %s189, %s191
      %p198 = scmp.eq.s32.totalorder %s29, 1
      %p199 = por %p197, %p198
      %p200 = scmp.ne.s32.totalorder %s191, %s192
      %p201 = scmp.eq.s32.totalorder %s29, 0
      %p202 = por %p200, %p201
      %p203 = scmp.ne.s32.totalorder %s191, %s192
      %p204 = scmp.eq.s32.totalorder %s30, 1
      %p205 = por %p203, %p204
      %p207 = scmp.ne.s32.totalorder %s192, %s206
      %p208 = scmp.eq.s32.totalorder %s30, 0
      %p209 = por %p207, %p208
      %s211 = sadd.s32 %s210, 1
      %p214 = scmp.eq.s32.totalorder %s24, 1
      %p215 = scmp.ne.s32.totalorder %s210, %s212
      %p216 = scmp.eq.s32.totalorder %s24, 0
      %p217 = por %p215, %p216
      %p218 = scmp.ne.s32.totalorder %s210, %s212
      %p219 = scmp.eq.s32.totalorder %s29, 1
      %p220 = por %p218, %p219
      %p221 = scmp.ne.s32.totalorder %s212, %s213
      %p222 = scmp.eq.s32.totalorder %s29, 0
      %p223 = por %p221, %p222
      %p224 = scmp.ne.s32.totalorder %s212, %s213
      %p225 = scmp.eq.s32.totalorder %s30, 1
      %p226 = por %p224, %p225
      %p228 = scmp.ne.s32.totalorder %s213, %s227
      %p229 = scmp.eq.s32.totalorder %s30, 0
      %p230 = por %p228, %p229
      %s231 = ssub.s32 %s24, %s31
      %p232 = scmp.eq.s32.totalorder %s231, 0
      %s234 = sadd.s32 %s233, 1
      %s235 = scalar_select %p232, %s233, %s234
      %p238 = pneg %p232
      %p239 = scmp.eq.s32.totalorder %s24, 1
      %p240 = por %p238, %p239
      %p241 = scmp.ne.s32.totalorder %s233, %s236
      %p242 = scmp.eq.s32.totalorder %s24, 0
      %p243 = por %p241, %p242
      %p244 = scmp.ne.s32.totalorder %s233, %s236
      %p245 = scmp.eq.s32.totalorder %s29, 1
      %p246 = por %p244, %p245
      %p247 = scmp.ne.s32.totalorder %s236, %s237
      %p248 = scmp.eq.s32.totalorder %s29, 0
      %p249 = por %p247, %p248
      %p250 = scmp.ne.s32.totalorder %s236, %s237
      %p251 = scmp.eq.s32.totalorder %s30, 1
      %p252 = por %p250, %p251
      %p254 = scmp.ne.s32.totalorder %s237, %s253
      %p255 = scmp.eq.s32.totalorder %s30, 0
      %p256 = por %p254, %p255
      %p257 = scmp.le.s32.totalorder 1, %s24
      %p258 = scmp.lt.s32.totalorder %s24, 3
      %p259 = pnand %p257, %p258
      %p260 = pneg %p259
      // Predicated region
      $region9: #{gate_add_norm.1} parent=5 // pred_check
        _
      $region10: #{gate_add_norm.1} parent=5 // pred_check_branch
        %262 = sbr.rel (%p259) target = $region12
      $region11: #{gate_add_norm.1} parent=5 // pred_region
        %s263 = ssub.s32 %s24, 1
        // Predicated region
        $region13: #{gate_add_norm.1} parent=11 // pred_check
          %p264 = pneg %p97
        $region14: #{gate_add_norm.1} parent=11 // pred_check_branch
          %266 = sbr.rel (%p264) target = $region16
        $region15: #{gate_add_norm.1} parent=11 // pred_region
          _
        $region16: #{gate_add_norm.1} parent=11 // pred_fallthru
          _
        // Predicated region
        $region17: #{gate_add_norm.1} parent=11 // pred_check
          %p267 = pneg %p118
        $region18: #{gate_add_norm.1} parent=11 // pred_check_branch
          %269 = sbr.rel (%p267) target = $region20
        $region19: #{gate_add_norm.1} parent=11 // pred_region
          _
        $region20: #{gate_add_norm.1} parent=11 // pred_fallthru
          _
        // Predicated region
        $region21: #{gate_add_norm.1} parent=11 // pred_check
          %p270 = pneg %p139
        $region22: #{gate_add_norm.1} parent=11 // pred_check_branch
          %272 = sbr.rel (%p270) target = $region24
        $region23: #{gate_add_norm.1} parent=11 // pred_region
          _
        $region24: #{gate_add_norm.1} parent=11 // pred_fallthru
          _
        // Predicated region
        $region25: #{gate_add_norm.1} parent=11 // pred_check
          %p273 = pneg %p160
        $region26: #{gate_add_norm.1} parent=11 // pred_check_branch
          %275 = sbr.rel (%p273) target = $region28
        $region27: #{gate_add_norm.1} parent=11 // pred_region
          _
        $region28: #{gate_add_norm.1} parent=11 // pred_fallthru
          _
        // Predicated region
        $region29: #{gate_add_norm.1} parent=11 // pred_check
          %p276 = pneg %p181
        $region30: #{gate_add_norm.1} parent=11 // pred_check_branch
          %278 = sbr.rel (%p276) target = $region32
        $region31: #{gate_add_norm.1} parent=11 // pred_region
          _
        $region32: #{gate_add_norm.1} parent=11 // pred_fallthru
          _
        // Predicated region
        $region33: #{gate_add_norm.1} parent=11 // pred_check
          %p279 = pneg %p202
        $region34: #{gate_add_norm.1} parent=11 // pred_check_branch
          %281 = sbr.rel (%p279) target = $region36
        $region35: #{gate_add_norm.1} parent=11 // pred_region
          _
        $region36: #{gate_add_norm.1} parent=11 // pred_fallthru
          _
        // Predicated region
        $region37: #{gate_add_norm.1} parent=11 // pred_check
          %p282 = pneg %p223
        $region38: #{gate_add_norm.1} parent=11 // pred_check_branch
          %284 = sbr.rel (%p282) target = $region40
        $region39: #{gate_add_norm.1} parent=11 // pred_region
          _
        $region40: #{gate_add_norm.1} parent=11 // pred_fallthru
          _
      $region12: #{gate_add_norm.1} parent=5 // pred_fallthru
        _
      %p285 = scmp.lt.s32.totalorder %s24, 2
      // Predicated region
      $region41: #{gate_add_norm.1} parent=5 // pred_check
        %p286 = pneg %p285
      $region42: #{gate_add_norm.1} parent=5 // pred_check_branch
        %288 = sbr.rel (%p286) target = $region44
      $region43: #{gate_add_norm.1} parent=5 // pred_region
        // Predicated region
        $region45: #{gate_add_norm.1} parent=43 // pred_check
          %p289 = pneg %p44
        $region46: #{gate_add_norm.1} parent=43 // pred_check_branch
          %291 = sbr.rel (%p289) target = $region48
        $region47: #{gate_add_norm.1} parent=43 // pred_region
          %s292 = sand.u32 %s34, 1
          %s293 = scalar_lea.sflag [#allocation3], %s292
          %s294 = sand.u32 %s34, 1
          %s295 = smul.addr %s294, 8
          %s296 = scalar_lea.vmem [#allocation2], %s295
          %s298 = ssub.s32 128, 128
          %299 = vsyncadd %s293, %s298
          %s300 = smul.addr %s24, 128
          %s301 = scalar_lea.hbm %s0, %s300
          %s303 = sshll.u32 %s296, 4
          %s304 = int_to_ptr.vmem [resolvable:$true] %s303
          %306 = dma.hbm_to_vmem [thread:$0]  %s301, 128, %s304, %s293
        $region48: #{gate_add_norm.1} parent=43 // pred_fallthru
          _
        // Predicated region
        $region49: #{gate_add_norm.1} parent=43 // pred_check
          %p307 = pneg %p70
        $region50: #{gate_add_norm.1} parent=43 // pred_check_branch
          %309 = sbr.rel (%p307) target = $region52
        $region51: #{gate_add_norm.1} parent=43 // pred_region
          %s310 = sand.u32 %s60, 1
          %s311 = scalar_lea.sflag [#allocation6], %s310
          %s312 = sand.u32 %s60, 1
          %s313 = smul.addr %s312, 8
          %s314 = scalar_lea.vmem [#allocation5], %s313
          %s316 = ssub.s32 128, 128
          %317 = vsyncadd %s311, %s316
          %s318 = smul.addr %s24, 128
          %s319 = scalar_lea.hbm %s1, %s318
          %s321 = sshll.u32 %s314, 4
          %s322 = int_to_ptr.vmem [resolvable:$true] %s321
          %324 = dma.hbm_to_vmem [thread:$0]  %s319, 128, %s322, %s311
        $region52: #{gate_add_norm.1} parent=43 // pred_fallthru
          _
      $region44: #{gate_add_norm.1} parent=5 // pred_fallthru
        _
      %p325 = scmp.le.s32.totalorder 1, %s24
      %p326 = scmp.lt.s32.totalorder %s24, 3
      %p327 = pnand %p325, %p326
      %p328 = pneg %p327
      // Predicated region
      $region53: #{gate_add_norm.1} parent=5 // pred_check
        _
      $region54: #{gate_add_norm.1} parent=5 // pred_check_branch
        %330 = sbr.rel (%p327) target = $region56
      $region55: #{gate_add_norm.1} parent=5 // pred_region
        %s331 = ssub.s32 %s24, 1
        %s332 = sand.u32 %s37, 1
        %s333 = scalar_lea.sflag [#allocation3], %s332
        %s334 = sand.u32 %s37, 1
        %s335 = smul.addr %s334, 8
        %s336 = scalar_lea.vmem [#allocation2], %s335
        // Predicated region
        $region57: #{gate_add_norm.1} parent=55 // pred_check
          %p337 = pneg %p50
        $region58: #{gate_add_norm.1} parent=55 // pred_check_branch
          %339 = sbr.rel (%p337) target = $region60
        $region59: #{gate_add_norm.1} parent=55 // pred_region
          %340 = dma.done %s333, 128
        $region60: #{gate_add_norm.1} parent=55 // pred_fallthru
          _
        %s341 = sand.u32 %s63, 1
        %s342 = scalar_lea.sflag [#allocation6], %s341
        %s343 = sand.u32 %s63, 1
        %s344 = smul.addr %s343, 8
        %s345 = scalar_lea.vmem [#allocation5], %s344
        // Predicated region
        $region61: #{gate_add_norm.1} parent=55 // pred_check
          %p346 = pneg %p76
        $region62: #{gate_add_norm.1} parent=55 // pred_check_branch
          %348 = sbr.rel (%p346) target = $region64
        $region63: #{gate_add_norm.1} parent=55 // pred_region
          %349 = dma.done %s342, 128
        $region64: #{gate_add_norm.1} parent=55 // pred_fallthru
          _
        %s350 = sand.u32 %s37, 1
        %s351 = scalar_lea.sflag [#allocation3], %s350
        %s352 = sand.u32 %s37, 1
        %s353 = smul.addr %s352, 8
        %s354 = scalar_lea.vmem [#allocation2], %s353
        %p355 = pneg %p50
        %p356 = pneg %p47
        %s357 = sand.u32 %s63, 1
        %s358 = scalar_lea.sflag [#allocation6], %s357
        %s359 = sand.u32 %s63, 1
        %s360 = smul.addr %s359, 8
        %s361 = scalar_lea.vmem [#allocation5], %s360
        %p362 = pneg %p76
        %p363 = pneg %p73
        %p364 = pneg %p97
        %p365 = pneg %p94
        %p366 = pneg %p118
        %p367 = pneg %p115
        %p368 = pneg %p139
        %p369 = pneg %p136
        %p370 = pneg %p160
        %p371 = pneg %p157
        %p372 = pneg %p181
        %p373 = pneg %p178
        %p374 = pneg %p202
        %p375 = pneg %p199
        %p376 = pneg %p223
        %p377 = pneg %p220
        %p378 = pneg %p249
        %p379 = pneg %p246
        %s380 = sand.u32 %s236, 1
        %s381 = scalar_lea.sflag [#allocation4], %s380
        %s382 = sand.u32 %s236, 1
        %s383 = smul.addr %s382, 8
        %s384 = scalar_lea.vmem [#allocation7], %s383
        %v385 = vld [vmem:[%s336] sm:$0xff]
        %v386 = vld [vmem:[%s2] sm:$0xff]
        %v387 = vld [vmem:[%s2 + $0x8] sm:$0xff]
        %v388 = vld [vmem:[%s2 + $0x10] sm:$0xff]
        %v389 = vld [vmem:[%s2 + $0x18] sm:$0xff]
        %v390 = vld [vmem:[%s3] sm:$0x1]
        %v392 = vlaneseq
        %v393 = vshrl.u32 %v392, 7
        %v394 = vsub.s32 0, %v393
        %v395 = vrot.slane %v390, %v394
        %vm397 = vcmask 261120
        %v399 = vsel %vm397, %v385, 0
        %401 = vmatprep.subr.mxu0 0.0
        %402 = vmatpush1.msra.mxu0 %v386
        %403 = vmatprep.subr.mxu0 0.0
        %404 = vmatpush1.msra.mxu0 %v387
        %405 = vmatprep.subr.mxu0 0.0
        %406 = vmatpush1.msra.mxu0 %v388
        %407 = vmatprep.subr.mxu0 0.0
        %408 = vmatpush1.msra.mxu0 %v389
        %409 = vmatprep.subr.mxu0 0.0
        %410 = vmatpush1.msra.mxu0 0.0
        %411 = vmatprep.subr.mxu0 0.0
        %412 = vmatpush1.msra.mxu0 0.0
        %413 = vmatprep.subr.mxu0 0.0
        %414 = vmatpush1.msra.mxu0 0.0
        %415 = vmatprep.subr.mxu0 0.0
        %416 = vmatpush1.msra.mxu0 0.0
        %417 = vmatprep.subr.mxu0 0.0
        %418 = vmatpush1.msra.mxu0 0.0
        %419 = vmatprep.subr.mxu0 0.0
        %420 = vmatpush1.msra.mxu0 0.0
        %421 = vmatprep.subr.mxu0 0.0
        %422 = vmatpush1.msra.mxu0 0.0
        %423 = vmatprep.subr.mxu0 0.0
        %424 = vmatpush1.msra.mxu0 0.0
        %425 = vmatprep.subr.mxu0 0.0
        %426 = vmatpush1.msra.mxu0 0.0
        %427 = vmatprep.subr.mxu0 0.0
        %428 = vmatpush1.msra.mxu0 0.0
        %429 = vmatprep.subr.mxu0 0.0
        %430 = vmatpush1.msra.mxu0 0.0
        %431 = vmatprep.subr.mxu0 0.0
        %432 = vmatpush1.msra.mxu0 0.0
        %433 = vmatprep.subr.mxu0 0.0
        %434 = vmatpush1.msra.mxu0 0.0
        %435 = vmatprep.subr.mxu0 0.0
        %436 = vmatpush1.msra.mxu0 0.0
        %437 = vmatprep.subr.mxu0 0.0
        %438 = vmatpush1.msra.mxu0 0.0
        %439 = vmatprep.subr.mxu0 0.0
        %440 = vmatpush1.msra.mxu0 0.0
        %441 = vmatprep.subr.mxu0 0.0
        %442 = vmatpush1.msra.mxu0 0.0
        %443 = vmatprep.subr.mxu0 0.0
        %444 = vmatpush1.msra.mxu0 0.0
        %445 = vmatprep.subr.mxu0 0.0
        %446 = vmatpush1.msra.mxu0 0.0
        %447 = vmatprep.subr.mxu0 0.0
        %448 = vmatpush1.msra.mxu0 0.0
        %449 = vmatprep.subr.mxu0 0.0
        %450 = vmatpush1.msra.mxu0 0.0
        %451 = vmatprep.subr.mxu0 0.0
        %452 = vmatpush1.msra.mxu0 0.0
        %453 = vmatprep.subr.mxu0 0.0
        %454 = vmatpush1.msra.mxu0 0.0
        %455 = vmatprep.subr.mxu0 0.0
        %456 = vmatpush1.msra.mxu0 0.0
        %457 = vmatprep.subr.mxu0 0.0
        %458 = vmatpush1.msra.mxu0 0.0
        %459 = vmatprep.subr.mxu0 0.0
        %460 = vmatpush1.msra.mxu0 0.0
        %461 = vmatprep.subr.mxu0 0.0
        %462 = vmatpush1.msra.mxu0 0.0
        %463 = vmatprep.subr.mxu0 0.0
        %464 = vmatpush1.msra.mxu0 0.0
        %465 = vmatprep.mubr.f32.mxu0 0.0
        %466 = vmatmul.mubr.f32.gmra.mrb[0].mxu0 %v399
        %v467 = vpop.f32.mrb[0].mxu0
        %v468 = vadd.f32 %v395, %v467
        %v469 = vpop.f32.mrb[0].mxu0
        %470 = vdwg.mxu0
        %v471 = vld [vmem:[%s4] sm:$0xff]
        %v472 = vld [vmem:[%s4 + $0x8] sm:$0xff]
        %v473 = vld [vmem:[%s4 + $0x10] sm:$0xff]
        %v474 = vld [vmem:[%s4 + $0x18] sm:$0xff]
        %v475 = vld [vmem:[%s5] sm:$0x1]
        %v477 = vlaneseq
        %v478 = vshrl.u32 %v477, 7
        %v479 = vsub.s32 0, %v478
        %v480 = vrot.slane %v475, %v479
        %482 = vmatprep.subr.mxu0 0.0
        %483 = vmatpush1.msra.mxu0 %v471
        %484 = vmatprep.subr.mxu0 0.0
        %485 = vmatpush1.msra.mxu0 %v472
        %486 = vmatprep.subr.mxu0 0.0
        %487 = vmatpush1.msra.mxu0 %v473
        %488 = vmatprep.subr.mxu0 0.0
        %489 = vmatpush1.msra.mxu0 %v474
        %490 = vmatprep.subr.mxu0 0.0
        %491 = vmatpush1.msra.mxu0 0.0
        %492 = vmatprep.subr.mxu0 0.0
        %493 = vmatpush1.msra.mxu0 0.0
        %494 = vmatprep.subr.mxu0 0.0
        %495 = vmatpush1.msra.mxu0 0.0
        %496 = vmatprep.subr.mxu0 0.0
        %497 = vmatpush1.msra.mxu0 0.0
        %498 = vmatprep.subr.mxu0 0.0
        %499 = vmatpush1.msra.mxu0 0.0
        %500 = vmatprep.subr.mxu0 0.0
        %501 = vmatpush1.msra.mxu0 0.0
        %502 = vmatprep.subr.mxu0 0.0
        %503 = vmatpush1.msra.mxu0 0.0
        %504 = vmatprep.subr.mxu0 0.0
        %505 = vmatpush1.msra.mxu0 0.0
        %506 = vmatprep.subr.mxu0 0.0
        %507 = vmatpush1.msra.mxu0 0.0
        %508 = vmatprep.subr.mxu0 0.0
        %509 = vmatpush1.msra.mxu0 0.0
        %510 = vmatprep.subr.mxu0 0.0
        %511 = vmatpush1.msra.mxu0 0.0
        %512 = vmatprep.subr.mxu0 0.0
        %513 = vmatpush1.msra.mxu0 0.0
        %514 = vmatprep.subr.mxu0 0.0
        %515 = vmatpush1.msra.mxu0 0.0
        %516 = vmatprep.subr.mxu0 0.0
        %517 = vmatpush1.msra.mxu0 0.0
        %518 = vmatprep.subr.mxu0 0.0
        %519 = vmatpush1.msra.mxu0 0.0
        %520 = vmatprep.subr.mxu0 0.0
        %521 = vmatpush1.msra.mxu0 0.0
        %522 = vmatprep.subr.mxu0 0.0
        %523 = vmatpush1.msra.mxu0 0.0
        %524 = vmatprep.subr.mxu0 0.0
        %525 = vmatpush1.msra.mxu0 0.0
        %526 = vmatprep.subr.mxu0 0.0
        %527 = vmatpush1.msra.mxu0 0.0
        %528 = vmatprep.subr.mxu0 0.0
        %529 = vmatpush1.msra.mxu0 0.0
        %530 = vmatprep.subr.mxu0 0.0
        %531 = vmatpush1.msra.mxu0 0.0
        %532 = vmatprep.subr.mxu0 0.0
        %533 = vmatpush1.msra.mxu0 0.0
        %534 = vmatprep.subr.mxu0 0.0
        %535 = vmatpush1.msra.mxu0 0.0
        %536 = vmatprep.subr.mxu0 0.0
        %537 = vmatpush1.msra.mxu0 0.0
        %538 = vmatprep.subr.mxu0 0.0
        %539 = vmatpush1.msra.mxu0 0.0
        %540 = vmatprep.subr.mxu0 0.0
        %541 = vmatpush1.msra.mxu0 0.0
        %542 = vmatprep.subr.mxu0 0.0
        %543 = vmatpush1.msra.mxu0 0.0
        %544 = vmatprep.subr.mxu0 0.0
        %545 = vmatpush1.msra.mxu0 0.0
        %546 = vmatprep.mubr.f32.mxu0 0.0
        %547 = vmatmul.mubr.f32.gmra.mrb[0].mxu0 %v399
        %v548 = vpop.f32.mrb[0].mxu0
        %v549 = vadd.f32 %v480, %v548
        %v550 = vpop.f32.mrb[0].mxu0
        %551 = vdwg.mxu0
        %v552 = vxor.u32 %v549, 2147483648
        %v553 = vmul.f32 %v552, 1.442695
        %v554 = vpow.pop %v553
        %v555 = vadd.f32 %v554, 1.0
        %v556 = vrcp.pop %v555
        %v557 = vmul.f32 1.0, %v556
        %v558 = vmul.f32 %v468, %v557
        %v559 = vld [vmem:[%s345] sm:$0xff]
        %v560 = vld [vmem:[%s6] sm:$0xff]
        %v561 = vld [vmem:[%s6 + $0x8] sm:$0xff]
        %vm562 = vcmask 130048
        %v564 = vsel %vm562, %v559, 0
        %566 = vmatprep.subr.mxu0 0.0
        %567 = vmatpush1.msra.mxu0 %v560
        %568 = vmatprep.subr.mxu0 0.0
        %569 = vmatpush1.msra.mxu0 %v561
        %570 = vmatprep.subr.mxu0 0.0
        %571 = vmatpush1.msra.mxu0 0.0
        %572 = vmatprep.subr.mxu0 0.0
        %573 = vmatpush1.msra.mxu0 0.0
        %574 = vmatprep.subr.mxu0 0.0
        %575 = vmatpush1.msra.mxu0 0.0
        %576 = vmatprep.subr.mxu0 0.0
        %577 = vmatpush1.msra.mxu0 0.0
        %578 = vmatprep.subr.mxu0 0.0
        %579 = vmatpush1.msra.mxu0 0.0
        %580 = vmatprep.subr.mxu0 0.0
        %581 = vmatpush1.msra.mxu0 0.0
        %582 = vmatprep.subr.mxu0 0.0
        %583 = vmatpush1.msra.mxu0 0.0
        %584 = vmatprep.subr.mxu0 0.0
        %585 = vmatpush1.msra.mxu0 0.0
        %586 = vmatprep.subr.mxu0 0.0
        %587 = vmatpush1.msra.mxu0 0.0
        %588 = vmatprep.subr.mxu0 0.0
        %589 = vmatpush1.msra.mxu0 0.0
        %590 = vmatprep.subr.mxu0 0.0
        %591 = vmatpush1.msra.mxu0 0.0
        %592 = vmatprep.subr.mxu0 0.0
        %593 = vmatpush1.msra.mxu0 0.0
        %594 = vmatprep.subr.mxu0 0.0
        %595 = vmatpush1.msra.mxu0 0.0
        %596 = vmatprep.subr.mxu0 0.0
        %597 = vmatpush1.msra.mxu0 0.0
        %598 = vmatprep.subr.mxu0 0.0
        %599 = vmatpush1.msra.mxu0 0.0
        %600 = vmatprep.subr.mxu0 0.0
        %601 = vmatpush1.msra.mxu0 0.0
        %602 = vmatprep.subr.mxu0 0.0
        %603 = vmatpush1.msra.mxu0 0.0
        %604 = vmatprep.subr.mxu0 0.0
        %605 = vmatpush1.msra.mxu0 0.0
        %606 = vmatprep.subr.mxu0 0.0
        %607 = vmatpush1.msra.mxu0 0.0
        %608 = vmatprep.subr.mxu0 0.0
        %609 = vmatpush1.msra.mxu0 0.0
        %610 = vmatprep.subr.mxu0 0.0
        %611 = vmatpush1.msra.mxu0 0.0
        %612 = vmatprep.subr.mxu0 0.0
        %613 = vmatpush1.msra.mxu0 0.0
        %614 = vmatprep.subr.mxu0 0.0
        %615 = vmatpush1.msra.mxu0 0.0
        %616 = vmatprep.subr.mxu0 0.0
        %617 = vmatpush1.msra.mxu0 0.0
        %618 = vmatprep.subr.mxu0 0.0
        %619 = vmatpush1.msra.mxu0 0.0
        %620 = vmatprep.subr.mxu0 0.0
        %621 = vmatpush1.msra.mxu0 0.0
        %622 = vmatprep.subr.mxu0 0.0
        %623 = vmatpush1.msra.mxu0 0.0
        %624 = vmatprep.subr.mxu0 0.0
        %625 = vmatpush1.msra.mxu0 0.0
        %626 = vmatprep.subr.mxu0 0.0
        %627 = vmatpush1.msra.mxu0 0.0
        %628 = vmatprep.subr.mxu0 0.0
        %629 = vmatpush1.msra.mxu0 0.0
        %630 = vmatprep.mubr.f32.mxu0 0.0
        %631 = vmatmul.mubr.f32.gmra.mrb[0].mxu0 %v564
        %v632 = vpop.f32.mrb[0].mxu0
        %v633 = vadd.f32 0.0, %v632
        %v634 = vpop.f32.mrb[0].mxu0
        %635 = vdwg.mxu0
        %v636 = vadd.f32 %v558, %v633
        %v637 = vsel %vm397, %v636, 0.0
        %638 = vadd.xlane.f32.xlu0 %v637
        %v639 = vpop.xlane.xlu0 %638
        %v640 = vrcp.pop 32.0
        %v641 = vmul.f32 %v639, %v640
        %v642 = vsub.f32 %v636, %v641
        %v643 = vmul.f32 %v642, %v642
        %v644 = vsel %vm397, %v643, 0.0
        %645 = vadd.xlane.f32.xlu0 %v644
        %v646 = vpop.xlane.xlu0 %645
        %v647 = vmul.f32 %v646, %v640
        %v648 = vadd.f32 %v647, 1e-05
        %v649 = vrsqrt.pop %v648
        %v650 = vld [vmem:[%s7] sm:$0x1]
        %v652 = vlaneseq
        %v653 = vshrl.u32 %v652, 7
        %v654 = vsub.s32 0, %v653
        %v655 = vrot.slane %v650, %v654
        %v657 = vmul.f32 %v649, %v655
        %v658 = vmul.f32 %v642, %v657
        %v659 = vld [vmem:[%s8] sm:$0x1]
        %v661 = vlaneseq
        %v662 = vshrl.u32 %v661, 7
        %v663 = vsub.s32 0, %v662
        %v664 = vrot.slane %v659, %v663
        %v666 = vadd.f32 %v658, %v664
        %667 = vst.msk [vmem:[%s384] sm:$0xff] %vm397, %v666
        %s668 = sand.u32 %s236, 1
        %s669 = scalar_lea.sflag [#allocation4], %s668
        %s670 = sand.u32 %s236, 1
        %s671 = smul.addr %s670, 8
        %s672 = scalar_lea.vmem [#allocation7], %s671
        // Predicated region
        $region65: #{gate_add_norm.1} parent=55 // pred_check
          %p673 = pneg %p246
        $region66: #{gate_add_norm.1} parent=55 // pred_check_branch
          %675 = sbr.rel (%p673) target = $region68
        $region67: #{gate_add_norm.1} parent=55 // pred_region
          %s677 = ssub.s32 128, 128
          %678 = vsyncadd %s669, %s677
          %s679 = smul.addr %s29, 128
          %s680 = scalar_lea.hbm %s9, %s679
          %s682 = sshll.u32 %s672, 4
          %s683 = int_to_ptr.vmem [resolvable:$true] %s682
          %685 = dma.vmem_to_hbm [thread:$0]  %s683, 128, %s680, %s669
        $region68: #{gate_add_norm.1} parent=55 // pred_fallthru
          _
      $region56: #{gate_add_norm.1} parent=5 // pred_fallthru
        _
      %p686 = scmp.le.s32.totalorder 2, %s24
      // Predicated region
      $region69: #{gate_add_norm.1} parent=5 // pred_check
        %p687 = pneg %p686
      $region70: #{gate_add_norm.1} parent=5 // pred_check_branch
        %689 = sbr.rel (%p687) target = $region72
      $region71: #{gate_add_norm.1} parent=5 // pred_region
        %s690 = ssub.s32 %s24, 2
        // Predicated region
        $region73: #{gate_add_norm.1} parent=71 // pred_check
          %p691 = pneg %p252
        $region74: #{gate_add_norm.1} parent=71 // pred_check_branch
          %693 = sbr.rel (%p691) target = $region76
        $region75: #{gate_add_norm.1} parent=71 // pred_region
          %s694 = sand.u32 %s237, 1
          %s695 = scalar_lea.sflag [#allocation4], %s694
          %s696 = sand.u32 %s237, 1
          %s697 = smul.addr %s696, 8
          %s698 = scalar_lea.vmem [#allocation7], %s697
          %699 = dma.done %s695, 128
        $region76: #{gate_add_norm.1} parent=71 // pred_fallthru
          _
      $region72: #{gate_add_norm.1} parent=5 // pred_fallthru
        _
    $region6: #{gate_add_norm.1} parent=1 // loop_footer
      %s28 = sadd.s32 1, %s24
    $region7: #{gate_add_norm.1} parent=1 // loop_footer_branch
      %23 = sbr.rel target = $region3
    $region8: #{gate_add_norm.1} parent=1 // loop_exit
      _
    %700 = vsyncpa [#allocation3], 1
    %s701 = scalar_lea.sflag [#allocation3], 1
    %702 = vsyncpa %s701, 1
    %703 = vsyncpa [#allocation6], 1
    %s704 = scalar_lea.sflag [#allocation6], 1
    %705 = vsyncpa %s704, 1
    %706 = vsyncpa [#allocation4], 1
    %s707 = scalar_lea.sflag [#allocation4], 1
    %708 = vsyncpa %s707, 1

</llo_original>
